<compile_context>
chip_gen: v6e
topology: v6e:2x2x1
jax: 0.10.0
libtpu: 0.0.40
codegen_flags: <defaults>
</compile_context>

<pallas_src>
import functools

import jax
import jax.numpy as jnp
from jax import lax
from jax.experimental import pallas as pl
from jax.experimental.pallas import tpu as pltpu


def _soft_xent_kernel(x_ref, t_ref, out_ref, acc_ref, tmp_ref, *,
                      ignore_index, n_split, tiles_per_split,
                      tile_units, total_units):
    """One (C, spatial-tile) block; spatial layout is either (C, S_tile, 128)
    when H*W is a multiple of 128, or flat (C, tile_hw) otherwise."""
    t = pl.program_id(1)

    # Reset the per-image vector accumulator on the first spatial tile.
    @pl.when(t == 0)
    def _():
        acc_ref[...] = jnp.zeros_like(acc_ref)

    x = x_ref[0].astype(jnp.float32)      # (C, ...) logits
    tgt = t_ref[0].astype(jnp.float32)    # (C, ...) target distribution

    # Numerically-stable log_softmax over the class axis (leading axis).
    # In the (C, S, 128) layout this reduction is pure VPU work across the C
    # vreg planes — no XLU cross-lane ops in the steady state.
    m = jnp.max(x, axis=0, keepdims=True)
    lse = m + jnp.log(jnp.sum(jnp.exp(x - m), axis=0, keepdims=True))
    logp = x - lse

    mask = tgt != jnp.float32(ignore_index)
    # Keep select semantics: padded/garbage lanes may hold Inf/NaN logits, so
    # never turn this into a multiply-by-mask.
    contrib = jnp.where(mask, -logp * tgt, jnp.float32(0.0))
    cnt = mask.astype(jnp.float32)

    def accumulate(c_arr, n_arr):
        # Class-axis reduce + VPU accumulate into the (1, tile, ...) rows; the
        # single cross-lane reduction is deferred to the finalize block.
        acc_ref[0] += jnp.sum(c_arr, axis=0, keepdims=True)
        acc_ref[1] += jnp.sum(n_arr, axis=0, keepdims=True)

    # Only tiles overhanging the true spatial extent pay the iota/compare.
    if n_split * tiles_per_split * tile_units > total_units:
        g = pl.program_id(0)
        tg = (g % n_split) * tiles_per_split + t          # global tile index
        partial = (tg + 1) * tile_units > total_units

        @pl.when(jnp.logical_not(partial))
        def _():
            accumulate(contrib, cnt)

        @pl.when(partial)
        def _():
            idx = lax.broadcasted_iota(jnp.int32, x.shape, 1)
            valid = tg * tile_units + idx < total_units
            accumulate(jnp.where(valid, contrib, jnp.float32(0.0)),
                       jnp.where(valid, cnt, jnp.float32(0.0)))
    else:
        accumulate(contrib, cnt)

    # Finalize once per (image, core-split): one cross-lane reduction, one
    # lane-dense (8,128) write: sum lives in sublane 0, count in sublane 1+.
    @pl.when(t == pl.num_programs(1) - 1)
    def _():
        tmp_ref[0] = jnp.sum(acc_ref[0])
        tmp_ref[1] = jnp.sum(acc_ref[1])
        sub = lax.broadcasted_iota(jnp.int32, (8, 128), 0)
        out_ref[0] = jnp.where(
            sub == 0,
            jnp.full((8, 128), tmp_ref[0], jnp.float32),
            jnp.full((8, 128), tmp_ref[1], jnp.float32))


def _vmem_limit_bytes():
    # v5e/v6e: 128 MiB physical VMEM -> 64 MiB scoped limit.
    # v7x:      64 MiB physical      -> 48 MiB scoped limit.
    try:
        cap = int(pltpu.get_tpu_info().vmem_capacity_bytes)
    except Exception:
        cap = 64 * 1024 * 1024          # conservative (v7x-sized) fallback
    return min(cap * 3 // 4, 64 * 1024 * 1024)


def soft_cross_entropy(inputs, target, *, ignore_index=-1):
    """JAX/Pallas equivalent of softCrossEntropy.forward for (N, C, H, W)."""
    assert inputs.shape == target.shape
    N, C, H, W = inputs.shape
    hw = H * W

    vmem_limit = _vmem_limit_bytes()
    in_itemsize = max(jnp.dtype(inputs.dtype).itemsize,
                      jnp.dtype(target.dtype).itemsize)
    # Per-element VMEM cost: 2 inputs x 2 pipeline buffers (input dtype)
    # + ~4x f32 elementwise temporaries + class-reduced accumulator.
    bytes_per_elem = 4 * in_itemsize + 5 * 4
    max_elems = (vmem_limit * 3 // 4) // bytes_per_elem

    lane_dense = (hw % 128 == 0)
    if lane_dense:
        # Spatial axis folded to (S, 128): full vreg occupancy for small C and
        # class reductions stay on the VPU. Free metadata reshape.
        S = hw // 128
        total_units, unit_elems, gran = S, C * 128, 8
        x_r = inputs.reshape(N, C, S, 128)
        t_r = target.reshape(N, C, S, 128)
    else:
        # Fallback flat layout (C on sublanes, H*W on lanes).
        total_units, unit_elems, gran = hw, C, 128
        x_r = inputs.reshape(N, C, hw)
        t_r = target.reshape(N, C, hw)

    max_units = max_elems // unit_elems
    if max_units >= total_units:
        tile_units = total_units          # whole spatial extent in one tile
    else:
        tile_units = (max_units // gran) * gran
        if tile_units == 0:
            # TODO(synk): class-axis tiling with an online logsumexp for
            # vocab-scale C; the current class-resident block would not fit
            # VMEM (notably v7x's 64 MiB).
            raise ValueError(
                f"C={C} too large for a class-resident tile within the "
                f"{vmem_limit // 2**20} MiB VMEM budget")
    num_tiles = -(-total_units // tile_units)

    # Feed both TensorCores (v7x) when the batch alone cannot: split the
    # spatial tiles across the leading "parallel" grid axis.
    n_split = 2 if (N == 1 and num_tiles >= 2) else 1
    tiles_per_split = -(-num_tiles // n_split)

    def in_map(g, t):
        if n_split == 1:
            n, blk = g, t
        else:
            n = g // n_split
            blk = (g % n_split) * tiles_per_split + t
            blk = jnp.minimum(blk, num_tiles - 1)   # clamp phantom tiles
        return (n, 0, blk, 0) if lane_dense else (n, 0, blk)

    if lane_dense:
        blk_shape = (1, C, tile_units, 128)
        acc_shape = (2, 1, tile_units, 128)
    else:
        blk_shape = (1, C, tile_units)
        acc_shape = (2, 1, tile_units)

    kernel = functools.partial(
        _soft_xent_kernel, ignore_index=ignore_index, n_split=n_split,
        tiles_per_split=tiles_per_split, tile_units=tile_units,
        total_units=total_units)

    out = pl.pallas_call(
        kernel,
        grid=(N * n_split, tiles_per_split),
        in_specs=[pl.BlockSpec(blk_shape, in_map),
                  pl.BlockSpec(blk_shape, in_map)],
        out_specs=pl.BlockSpec((1, 8, 128), lambda g, t: (g, 0, 0)),
        out_shape=jax.ShapeDtypeStruct((N * n_split, 8, 128), jnp.float32),
        scratch_shapes=[pltpu.VMEM(acc_shape, jnp.float32),
                        pltpu.SMEM((2,), jnp.float32)],
        compiler_params=pltpu.CompilerParams(
            dimension_semantics=("parallel", "arbitrary"),
            vmem_limit_bytes=vmem_limit),
    )(x_r, t_r)

    total = jnp.sum(out[:, 0, 0])
    count = jnp.sum(out[:, 1, 0])
    return total / count


def _reference(inputs, target, ignore_index=-1):
    """Pure-JAX mirror of the PyTorch forward."""
    logp = jax.nn.log_softmax(inputs.astype(jnp.float32), axis=1)
    mask = target != ignore_index
    vals = jnp.where(mask, -logp * target.astype(jnp.float32), 0.0)
    return jnp.sum(vals) / jnp.sum(mask.astype(jnp.float32))


if __name__ == "__main__":
    key = jax.random.PRNGKey(0)
    k1, k2 = jax.random.split(key)

    N, C, H, W = 2, 4, 16, 16
    inputs = jax.random.normal(k1, (N, C, H, W), dtype=jnp.float32)
    target = jax.nn.softmax(
        jax.random.normal(k2, (N, C, H, W), dtype=jnp.float32), axis=1)
    # Exercise the ignore_index mask on a handful of elements.
    target = target.at[0, 1, 0, :8].set(-1.0)

    loss = jax.block_until_ready(
        soft_cross_entropy(inputs, target, ignore_index=-1))
    ref = jax.block_until_ready(_reference(inputs, target, ignore_index=-1))

    err = abs(float(loss) - float(ref))
    tol = 1e-3 * max(1.0, abs(float(ref)))
    assert err <= tol, f"mismatch: pallas={float(loss)} ref={float(ref)}"

    print("KERNEL_OK")
</pallas_src>

<mosaic_0001>
module attributes {stable_mosaic.version = 11 : i64} {
  func.func @_soft_xent_kernel(%arg0: i32, %arg1: i32, %arg2: memref<1x4x2x128xf32, #tpu.memory_space<vmem>>, %arg3: memref<1x4x2x128xf32, #tpu.memory_space<vmem>>, %arg4: memref<1x8x128xf32, #tpu.memory_space<vmem>>, %arg5: memref<2x1x2x128xf32, #tpu.memory_space<vmem>>, %arg6: memref<2xf32, #tpu.memory_space<smem>>) attributes {dimension_semantics = [#tpu.dimension_semantics<parallel>, #tpu.dimension_semantics<arbitrary>], iteration_bounds = array<i64: 2, 1>, scalar_prefetch = 0 : i64, scratch_operands = 2 : i64, tpu.core_type = #tpu.core_type<tc>, window_params = [{transform_indices = @transform_0, window_bounds = array<i64: 1, 4, 2, 128>}, {transform_indices = @transform_1, window_bounds = array<i64: 1, 4, 2, 128>}, {transform_indices = @transform_2, window_bounds = array<i64: 1, 8, 128>}]} {
    %c0_i32 = arith.constant 0 : i32
    %0 = arith.cmpi eq, %arg1, %c0_i32 : i32
    %1 = arith.extui %0 : i1 to i32
    %c0_i32_0 = arith.constant 0 : i32
    %2 = arith.cmpi ne, %1, %c0_i32_0 : i32
    scf.if %2 {
      %cst_31 = arith.constant 0.000000e+00 : f32
      %46 = vector.broadcast %cst_31 : f32 to vector<2x1x2x128xf32>
      %c0_32 = arith.constant 0 : index
      %c0_33 = arith.constant 0 : index
      %c0_34 = arith.constant 0 : index
      %c0_35 = arith.constant 0 : index
      %47 = vector.load %arg5[%c0_32, %c0_33, %c0_34, %c0_35] : memref<2x1x2x128xf32, #tpu.memory_space<vmem>>, vector<2x1x2x128xf32>
      tpu.vector_store %arg5[%c0_32, %c0_33, %c0_34, %c0_35], %46 {strides = array<i32>} : memref<2x1x2x128xf32, #tpu.memory_space<vmem>>, vector<2x1x2x128xf32>,
    } else {
    }
    %c0 = arith.constant 0 : index
    %c0_1 = arith.constant 0 : index
    %c0_2 = arith.constant 0 : index
    %c0_3 = arith.constant 0 : index
    %3 = vector.load %arg2[%c0, %c0_1, %c0_2, %c0_3] : memref<1x4x2x128xf32, #tpu.memory_space<vmem>>, vector<1x4x2x128xf32>
    %4 = vector.shape_cast %3 : vector<1x4x2x128xf32> to vector<4x2x128xf32>
    %c0_4 = arith.constant 0 : index
    %c0_5 = arith.constant 0 : index
    %c0_6 = arith.constant 0 : index
    %c0_7 = arith.constant 0 : index
    %5 = vector.load %arg3[%c0_4, %c0_5, %c0_6, %c0_7] : memref<1x4x2x128xf32, #tpu.memory_space<vmem>>, vector<1x4x2x128xf32>
    %6 = vector.shape_cast %5 : vector<1x4x2x128xf32> to vector<4x2x128xf32>
    %cst = arith.constant dense<0xFF800000> : vector<2x128xf32>
    %7 = vector.multi_reduction <maximumf>, %4, %cst [0] : vector<4x2x128xf32> to vector<2x128xf32>
    %8 = vector.shape_cast %7 : vector<2x128xf32> to vector<1x2x128xf32>
    %9 = vector.broadcast %8 : vector<1x2x128xf32> to vector<4x2x128xf32>
    %10 = arith.subf %4, %9 : vector<4x2x128xf32>
    %11 = math.exp %10 : vector<4x2x128xf32>
    %cst_8 = arith.constant dense<0.000000e+00> : vector<2x128xf32>
    %12 = vector.multi_reduction <add>, %11, %cst_8 [0] : vector<4x2x128xf32> to vector<2x128xf32>
    %13 = vector.shape_cast %12 : vector<2x128xf32> to vector<1x2x128xf32>
    %14 = math.log %13 : vector<1x2x128xf32>
    %15 = arith.addf %8, %14 : vector<1x2x128xf32>
    %16 = vector.broadcast %15 : vector<1x2x128xf32> to vector<4x2x128xf32>
    %17 = arith.subf %4, %16 : vector<4x2x128xf32>
    %cst_9 = arith.constant -1.000000e+00 : f32
    %18 = vector.broadcast %cst_9 : f32 to vector<4x2x128xf32>
    %19 = arith.cmpf one, %6, %18 : vector<4x2x128xf32>
    %cst_10 = arith.constant 0.000000e+00 : f32
    %20 = vector.broadcast %cst_10 : f32 to vector<4x2x128xf32>
    %21 = arith.subf %20, %17 : vector<4x2x128xf32>
    %22 = arith.mulf %21, %6 : vector<4x2x128xf32>
    %cst_11 = arith.constant 0.000000e+00 : f32
    %23 = vector.broadcast %cst_11 : f32 to vector<4x2x128xf32>
    %24 = arith.select %19, %22, %23 : vector<4x2x128xi1>, vector<4x2x128xf32>
    %25 = arith.extui %19 : vector<4x2x128xi1> to vector<4x2x128xi32>
    %26 = arith.sitofp %25 : vector<4x2x128xi32> to vector<4x2x128xf32>
    %c0_12 = arith.constant 0 : index
    %c0_13 = arith.constant 0 : index
    %c0_14 = arith.constant 0 : index
    %c0_15 = arith.constant 0 : index
    %27 = vector.load %arg5[%c0_12, %c0_13, %c0_14, %c0_15] : memref<2x1x2x128xf32, #tpu.memory_space<vmem>>, vector<1x1x2x128xf32>
    %28 = vector.shape_cast %27 : vector<1x1x2x128xf32> to vector<1x2x128xf32>
    %cst_16 = arith.constant dense<0.000000e+00> : vector<2x128xf32>
    %29 = vector.multi_reduction <add>, %24, %cst_16 [0] : vector<4x2x128xf32> to vector<2x128xf32>
    %30 = vector.shape_cast %29 : vector<2x128xf32> to vector<1x2x128xf32>
    %31 = arith.addf %28, %30 : vector<1x2x128xf32>
    %c0_17 = arith.constant 0 : index
    %c0_18 = arith.constant 0 : index
    %c0_19 = arith.constant 0 : index
    %c0_20 = arith.constant 0 : index
    %32 = vector.load %arg5[%c0_17, %c0_18, %c0_19, %c0_20] : memref<2x1x2x128xf32, #tpu.memory_space<vmem>>, vector<1x1x2x128xf32>
    %33 = vector.shape_cast %32 : vector<1x1x2x128xf32> to vector<1x2x128xf32>
    %34 = vector.shape_cast %31 : vector<1x2x128xf32> to vector<1x1x2x128xf32>
    tpu.vector_store %arg5[%c0_17, %c0_18, %c0_19, %c0_20], %34 {strides = array<i32>} : memref<2x1x2x128xf32, #tpu.memory_space<vmem>>, vector<1x1x2x128xf32>,
    %c1 = arith.constant 1 : index
    %c0_21 = arith.constant 0 : index
    %c0_22 = arith.constant 0 : index
    %c0_23 = arith.constant 0 : index
    %35 = vector.load %arg5[%c1, %c0_21, %c0_22, %c0_23] : memref<2x1x2x128xf32, #tpu.memory_space<vmem>>, vector<1x1x2x128xf32>
    %36 = vector.shape_cast %35 : vector<1x1x2x128xf32> to vector<1x2x128xf32>
    %cst_24 = arith.constant dense<0.000000e+00> : vector<2x128xf32>
    %37 = vector.multi_reduction <add>, %26, %cst_24 [0] : vector<4x2x128xf32> to vector<2x128xf32>
    %38 = vector.shape_cast %37 : vector<2x128xf32> to vector<1x2x128xf32>
    %39 = arith.addf %36, %38 : vector<1x2x128xf32>
    %c1_25 = arith.constant 1 : index
    %c0_26 = arith.constant 0 : index
    %c0_27 = arith.constant 0 : index
    %c0_28 = arith.constant 0 : index
    %40 = vector.load %arg5[%c1_25, %c0_26, %c0_27, %c0_28] : memref<2x1x2x128xf32, #tpu.memory_space<vmem>>, vector<1x1x2x128xf32>
    %41 = vector.shape_cast %40 : vector<1x1x2x128xf32> to vector<1x2x128xf32>
    %42 = vector.shape_cast %39 : vector<1x2x128xf32> to vector<1x1x2x128xf32>
    tpu.vector_store %arg5[%c1_25, %c0_26, %c0_27, %c0_28], %42 {strides = array<i32>} : memref<2x1x2x128xf32, #tpu.memory_space<vmem>>, vector<1x1x2x128xf32>,
    %c0_i32_29 = arith.constant 0 : i32
    %43 = arith.cmpi eq, %arg1, %c0_i32_29 : i32
    %44 = arith.extui %43 : i1 to i32
    %c0_i32_30 = arith.constant 0 : i32
    %45 = arith.cmpi ne, %44, %c0_i32_30 : i32
    scf.if %45 {
      %c0_31 = arith.constant 0 : index
      %c0_32 = arith.constant 0 : index
      %c0_33 = arith.constant 0 : index
      %c0_34 = arith.constant 0 : index
      %46 = vector.load %arg5[%c0_31, %c0_32, %c0_33, %c0_34] : memref<2x1x2x128xf32, #tpu.memory_space<vmem>>, vector<1x1x2x128xf32>
      %47 = vector.shape_cast %46 : vector<1x1x2x128xf32> to vector<1x2x128xf32>
      %48 = vector.shape_cast %47 : vector<1x2x128xf32> to vector<1x1x2x128xf32>
      %cst_35 = arith.constant dense<0.000000e+00> : vector<1xf32>
      %49 = vector.multi_reduction <add>, %48, %cst_35 [1, 2, 3] : vector<1x1x2x128xf32> to vector<1xf32>
      %50 = vector.shape_cast %49 : vector<1xf32> to vector<1x1x1x1xf32>
      %51 = vector.extract %50[0, 0, 0, 0] : f32 from vector<1x1x1x1xf32>
      %c0_36 = arith.constant 0 : index
      %52 = memref.load %arg6[%c0_36] : memref<2xf32, #tpu.memory_space<smem>>
      memref.store %51, %arg6[%c0_36] : memref<2xf32, #tpu.memory_space<smem>>
      %c1_37 = arith.constant 1 : index
      %c0_38 = arith.constant 0 : index
      %c0_39 = arith.constant 0 : index
      %c0_40 = arith.constant 0 : index
      %53 = vector.load %arg5[%c1_37, %c0_38, %c0_39, %c0_40] : memref<2x1x2x128xf32, #tpu.memory_space<vmem>>, vector<1x1x2x128xf32>
      %54 = vector.shape_cast %53 : vector<1x1x2x128xf32> to vector<1x2x128xf32>
      %55 = vector.shape_cast %54 : vector<1x2x128xf32> to vector<1x1x2x128xf32>
      %cst_41 = arith.constant dense<0.000000e+00> : vector<1xf32>
      %56 = vector.multi_reduction <add>, %55, %cst_41 [1, 2, 3] : vector<1x1x2x128xf32> to vector<1xf32>
      %57 = vector.shape_cast %56 : vector<1xf32> to vector<1x1x1x1xf32>
      %58 = vector.extract %57[0, 0, 0, 0] : f32 from vector<1x1x1x1xf32>
      %c1_42 = arith.constant 1 : index
      %59 = memref.load %arg6[%c1_42] : memref<2xf32, #tpu.memory_space<smem>>
      memref.store %58, %arg6[%c1_42] : memref<2xf32, #tpu.memory_space<smem>>
      %60 = tpu.iota {dimensions = array<i32: 0>} : vector<8x128xi32>
      %c0_i32_43 = arith.constant 0 : i32
      %61 = vector.broadcast %c0_i32_43 : i32 to vector<8x128xi32>
      %62 = arith.cmpi eq, %60, %61 : vector<8x128xi32>
      %c0_44 = arith.constant 0 : index
      %63 = memref.load %arg6[%c0_44] : memref<2xf32, #tpu.memory_space<smem>>
      %64 = vector.broadcast %63 : f32 to vector<8x128xf32>
      %c1_45 = arith.constant 1 : index
      %65 = memref.load %arg6[%c1_45] : memref<2xf32, #tpu.memory_space<smem>>
      %66 = vector.broadcast %65 : f32 to vector<8x128xf32>
      %67 = arith.select %62, %64, %66 : vector<8x128xi1>, vector<8x128xf32>
      %c0_46 = arith.constant 0 : index
      %c0_47 = arith.constant 0 : index
      %c0_48 = arith.constant 0 : index
      %68 = vector.load %arg4[%c0_46, %c0_47, %c0_48] : memref<1x8x128xf32, #tpu.memory_space<vmem>>, vector<1x8x128xf32>
      %69 = vector.shape_cast %68 : vector<1x8x128xf32> to vector<8x128xf32>
      %70 = vector.shape_cast %67 : vector<8x128xf32> to vector<1x8x128xf32>
      tpu.vector_store %arg4[%c0_46, %c0_47, %c0_48], %70 {strides = array<i32>} : memref<1x8x128xf32, #tpu.memory_space<vmem>>, vector<1x8x128xf32>,
    } else {
    }
    return
  }
  func.func @transform_0(%arg0: i32, %arg1: i32) -> (i32, i32, i32, i32) {
    %c0_i32 = arith.constant 0 : i32
    %c0_i32_0 = arith.constant 0 : i32
    %c0_i32_1 = arith.constant 0 : i32
    return %arg0, %c0_i32, %arg1, %c0_i32_0 : i32, i32, i32, i32
  }
  func.func @transform_1(%arg0: i32, %arg1: i32) -> (i32, i32, i32, i32) {
    %c0_i32 = arith.constant 0 : i32
    %c0_i32_0 = arith.constant 0 : i32
    %c0_i32_1 = arith.constant 0 : i32
    return %arg0, %c0_i32, %arg1, %c0_i32_0 : i32, i32, i32, i32
  }
  func.func @transform_2(%arg0: i32, %arg1: i32) -> (i32, i32, i32) {
    %c0_i32 = arith.constant 0 : i32
    %c0_i32_0 = arith.constant 0 : i32
    %c0_i32_1 = arith.constant 0 : i32
    return %arg0, %c0_i32, %c0_i32_0 : i32, i32, i32
  }
}

</mosaic_0001>

<llo_original>
// kernel: tpu_custom_call.1
$region0: #{tpu_custom_call.1}
  #allocation0 [shape = 'u32[]', space=smem, size = 0x4, offset = 0x4, fixed_abs, tag = 'smem constant byte address 0x4 - core index']
  #allocation1 [shape = 'u32[144,128]{1,0:T(1,128)}', space=vmem, size = 0x12000, scoped, tag = 'internal scratch']
  #allocation2 [shape = 'f32[2,1,2,128]{3,2,1,0:T(2,128)}', space=vmem, size = 0x800, scoped, tag = 'scratch operand']
  #allocation3 [shape = 'f32[2]{0:T(128)}', space=smem, size = 0x200, scoped, tag = 'scratch operand']
  %s0 = inlined_call_operand.hbm [shape: f32[2,4,2,128], index: 0, kind: input, shape index: {}]
  %s1 = inlined_call_operand.hbm [shape: f32[2,4,2,128], index: 1, kind: input, shape index: {}]
  %s2 = inlined_call_operand.hbm [shape: f32[2,8,128], index: 2, kind: output, shape index: {}]
  %s3 = sld [smem:[#allocation0]]
  $region57: #{tpu_custom_call.1} parent=0
    _
  %s5 = ssub.s32 1, %s3
  %s6 = scalar_select 0, %s5, %s3
  $region1: #{tpu_custom_call.1} parent=0
    #allocation4 [shape = 'u8[8192]{0}', space=vmem, size = 0x2000, scoped, tag = 'input window, operand 0']
    #allocation5 [shape = 's32[2]{0}', space=sflag, size = 0x8, scoped, tag = 'scoped memory for tpu_custom_call.1']
    #allocation6 [shape = 's32[2]{0}', space=sflag, size = 0x8, scoped, tag = 'scoped memory for tpu_custom_call.1']
    #allocation7 [shape = 'u8[8192]{0}', space=vmem, size = 0x2000, scoped, tag = 'input window, operand 1']
    #allocation8 [shape = 's32[2]{0}', space=sflag, size = 0x8, scoped, tag = 'scoped memory for tpu_custom_call.1']
    #allocation9 [shape = 'u8[8192]{0}', space=vmem, size = 0x2000, scoped, tag = 'output window, operand 0']
    %7 = vsyncpa [#allocation5], 0
    %s8 = scalar_lea.sflag [#allocation5], 1
    %9 = vsyncpa %s8, 0
    %10 = vsyncpa [#allocation8], 0
    %s11 = scalar_lea.sflag [#allocation8], 1
    %12 = vsyncpa %s11, 0
    %13 = vsyncpa [#allocation6], 0
    %s14 = scalar_lea.sflag [#allocation6], 1
    %15 = vsyncpa %s14, 0
    loop: start=0, step=1, limit=4
    $region2: #{tpu_custom_call.1} parent=1 // loop_pre_header
      _
    $region3: #{tpu_custom_call.1} parent=1 // loop_header
      %s17 = sphi 0, %s21
      %p18 = scmp.ge.s32.totalorder %s17, 4
      %s24 = sphi 0, %s36
      %s25 = sphi 0, %s32
      %s26 = sphi 0, %s24
      %s27 = sphi 0, %s25
      %s28 = sphi 0, %s26
      %s29 = sphi 0, %s27
      %s41 = sphi 0, %s43
      %s44 = sphi 0, %s41
      %s45 = sphi 0, %s44
      %s61 = sphi 0, %s45
      %s69 = sphi 0, %s71
      %s72 = sphi 0, %s69
      %s73 = sphi 0, %s72
      %s89 = sphi 0, %s73
      %s95 = sphi 0, %s97
      %s98 = sphi 0, %s95
      %s99 = sphi 0, %s98
      %s115 = sphi 0, %s99
    $region4: #{tpu_custom_call.1} parent=1 // loop_header_branch
      %20 = sbr.rel (%p18) target = $region8
    $region5: #{tpu_custom_call.1} parent=1 // loop_body
      %s22 = ssub.s32 %s17, 1
      %s23 = ssub.s32 %s17, 2
      %s30 = sadd.s32 1, %s25
      %p31 = scmp.ge.s32.totalorder %s30, 1
      %s32 = scalar_select %p31, 0, %s30
      %s33 = sadd.s32 1, %s24
      %s34 = scalar_select %p31, %s33, %s24
      %p35 = scmp.ge.s32.totalorder %s34, 2
      %s36 = scalar_select %p35, 0, %s34
      %s37 = ssub.s32 %s24, %s36
      %s38 = ssub.s32 %s25, %s32
      %s39 = sor.u32 %s37, %s38
      %p40 = scmp.eq.s32.totalorder %s39, 0
      %s42 = sadd.s32 %s41, 1
      %s43 = scalar_select %p40, %s41, %s42
      %p46 = pneg %p40
      %p47 = scmp.eq.s32.totalorder %s17, 1
      %p48 = por %p46, %p47
      %p49 = scmp.ne.s32.totalorder %s41, %s44
      %p50 = scmp.eq.s32.totalorder %s17, 0
      %p51 = por %p49, %p50
      %p52 = scmp.ne.s32.totalorder %s41, %s44
      %p53 = scmp.eq.s32.totalorder %s22, 1
      %p54 = por %p52, %p53
      %p55 = scmp.ne.s32.totalorder %s44, %s45
      %p56 = scmp.eq.s32.totalorder %s22, 0
      %p57 = por %p55, %p56
      %p58 = scmp.ne.s32.totalorder %s44, %s45
      %p59 = scmp.eq.s32.totalorder %s23, 1
      %p60 = por %p58, %p59
      %p62 = scmp.ne.s32.totalorder %s45, %s61
      %p63 = scmp.eq.s32.totalorder %s23, 0
      %p64 = por %p62, %p63
      %s65 = ssub.s32 %s24, %s36
      %s66 = ssub.s32 %s25, %s32
      %s67 = sor.u32 %s65, %s66
      %p68 = scmp.eq.s32.totalorder %s67, 0
      %s70 = sadd.s32 %s69, 1
      %s71 = scalar_select %p68, %s69, %s70
      %p74 = pneg %p68
      %p75 = scmp.eq.s32.totalorder %s17, 1
      %p76 = por %p74, %p75
      %p77 = scmp.ne.s32.totalorder %s69, %s72
      %p78 = scmp.eq.s32.totalorder %s17, 0
      %p79 = por %p77, %p78
      %p80 = scmp.ne.s32.totalorder %s69, %s72
      %p81 = scmp.eq.s32.totalorder %s22, 1
      %p82 = por %p80, %p81
      %p83 = scmp.ne.s32.totalorder %s72, %s73
      %p84 = scmp.eq.s32.totalorder %s22, 0
      %p85 = por %p83, %p84
      %p86 = scmp.ne.s32.totalorder %s72, %s73
      %p87 = scmp.eq.s32.totalorder %s23, 1
      %p88 = por %p86, %p87
      %p90 = scmp.ne.s32.totalorder %s73, %s89
      %p91 = scmp.eq.s32.totalorder %s23, 0
      %p92 = por %p90, %p91
      %s93 = ssub.s32 %s24, %s36
      %p94 = scmp.eq.s32.totalorder %s93, 0
      %s96 = sadd.s32 %s95, 1
      %s97 = scalar_select %p94, %s95, %s96
      %p100 = pneg %p94
      %p101 = scmp.eq.s32.totalorder %s17, 1
      %p102 = por %p100, %p101
      %p103 = scmp.ne.s32.totalorder %s95, %s98
      %p104 = scmp.eq.s32.totalorder %s17, 0
      %p105 = por %p103, %p104
      %p106 = scmp.ne.s32.totalorder %s95, %s98
      %p107 = scmp.eq.s32.totalorder %s22, 1
      %p108 = por %p106, %p107
      %p109 = scmp.ne.s32.totalorder %s98, %s99
      %p110 = scmp.eq.s32.totalorder %s22, 0
      %p111 = por %p109, %p110
      %p112 = scmp.ne.s32.totalorder %s98, %s99
      %p113 = scmp.eq.s32.totalorder %s23, 1
      %p114 = por %p112, %p113
      %p116 = scmp.ne.s32.totalorder %s99, %s115
      %p117 = scmp.eq.s32.totalorder %s23, 0
      %p118 = por %p116, %p117
      %p119 = scmp.le.s32.totalorder 1, %s17
      %p120 = scmp.lt.s32.totalorder %s17, 3
      %p121 = pnand %p119, %p120
      %p122 = pneg %p121
      // Predicated region
      $region9: #{tpu_custom_call.1} parent=5 // pred_check
        _
      $region10: #{tpu_custom_call.1} parent=5 // pred_check_branch
        %124 = sbr.rel (%p121) target = $region12
      $region11: #{tpu_custom_call.1} parent=5 // pred_region
        %s125 = ssub.s32 %s17, 1
      $region12: #{tpu_custom_call.1} parent=5 // pred_fallthru
        _
      %p126 = scmp.lt.s32.totalorder %s17, 2
      // Predicated region
      $region13: #{tpu_custom_call.1} parent=5 // pred_check
        %p127 = pneg %p126
      $region14: #{tpu_custom_call.1} parent=5 // pred_check_branch
        %129 = sbr.rel (%p127) target = $region16
      $region15: #{tpu_custom_call.1} parent=5 // pred_region
        // Predicated region
        $region17: #{tpu_custom_call.1} parent=15 // pred_check
          %p130 = pneg %p51
        $region18: #{tpu_custom_call.1} parent=15 // pred_check_branch
          %132 = sbr.rel (%p130) target = $region20
        $region19: #{tpu_custom_call.1} parent=15 // pred_region
          %s133 = sand.u32 %s41, 1
          %s134 = scalar_lea.sflag [#allocation5], %s133
          %s135 = sand.u32 %s41, 1
          %s136 = smul.addr %s135, 8
          %s137 = scalar_lea.vmem [#allocation4], %s136
          %s139 = ssub.s32 128, 128
          %140 = vsyncadd %s134, %s139
          %s141 = smul.addr %s24, 4
          %s142 = sadd.s32 %s25, %s141
          %s143 = smul.addr %s142, 32
          %s144 = scalar_lea.hbm %s0, %s143
          %s145 = sshll.u32 %s137, 4
          %s146 = int_to_ptr.vmem [resolvable:$true] %s145
          %151 = dma.hbm_to_vmem [thread:$0]  %s144, 128, %s146, %s134, 32, 32, 2
        $region20: #{tpu_custom_call.1} parent=15 // pred_fallthru
          _
        // Predicated region
        $region21: #{tpu_custom_call.1} parent=15 // pred_check
          %p152 = pneg %p79
        $region22: #{tpu_custom_call.1} parent=15 // pred_check_branch
          %154 = sbr.rel (%p152) target = $region24
        $region23: #{tpu_custom_call.1} parent=15 // pred_region
          %s155 = sand.u32 %s69, 1
          %s156 = scalar_lea.sflag [#allocation8], %s155
          %s157 = sand.u32 %s69, 1
          %s158 = smul.addr %s157, 8
          %s159 = scalar_lea.vmem [#allocation7], %s158
          %s161 = ssub.s32 128, 128
          %162 = vsyncadd %s156, %s161
          %s163 = smul.addr %s24, 4
          %s164 = sadd.s32 %s25, %s163
          %s165 = smul.addr %s164, 32
          %s166 = scalar_lea.hbm %s1, %s165
          %s167 = sshll.u32 %s159, 4
          %s168 = int_to_ptr.vmem [resolvable:$true] %s167
          %173 = dma.hbm_to_vmem [thread:$0]  %s166, 128, %s168, %s156, 32, 32, 2
        $region24: #{tpu_custom_call.1} parent=15 // pred_fallthru
          _
      $region16: #{tpu_custom_call.1} parent=5 // pred_fallthru
        _
      %p174 = scmp.le.s32.totalorder 1, %s17
      %p175 = scmp.lt.s32.totalorder %s17, 3
      %p176 = pnand %p174, %p175
      %p177 = pneg %p176
      // Predicated region
      $region25: #{tpu_custom_call.1} parent=5 // pred_check
        _
      $region26: #{tpu_custom_call.1} parent=5 // pred_check_branch
        %179 = sbr.rel (%p176) target = $region28
      $region27: #{tpu_custom_call.1} parent=5 // pred_region
        %s180 = ssub.s32 %s17, 1
        %s181 = sand.u32 %s44, 1
        %s182 = scalar_lea.sflag [#allocation5], %s181
        %s183 = sand.u32 %s44, 1
        %s184 = smul.addr %s183, 8
        %s185 = scalar_lea.vmem [#allocation4], %s184
        // Predicated region
        $region29: #{tpu_custom_call.1} parent=27 // pred_check
          %p186 = pneg %p57
        $region30: #{tpu_custom_call.1} parent=27 // pred_check_branch
          %188 = sbr.rel (%p186) target = $region32
        $region31: #{tpu_custom_call.1} parent=27 // pred_region
          %189 = dma.done %s182, 128
        $region32: #{tpu_custom_call.1} parent=27 // pred_fallthru
          _
        %s190 = sand.u32 %s72, 1
        %s191 = scalar_lea.sflag [#allocation8], %s190
        %s192 = sand.u32 %s72, 1
        %s193 = smul.addr %s192, 8
        %s194 = scalar_lea.vmem [#allocation7], %s193
        // Predicated region
        $region33: #{tpu_custom_call.1} parent=27 // pred_check
          %p195 = pneg %p85
        $region34: #{tpu_custom_call.1} parent=27 // pred_check_branch
          %197 = sbr.rel (%p195) target = $region36
        $region35: #{tpu_custom_call.1} parent=27 // pred_region
          %198 = dma.done %s191, 128
        $region36: #{tpu_custom_call.1} parent=27 // pred_fallthru
          _
        %s199 = sand.u32 %s44, 1
        %s200 = scalar_lea.sflag [#allocation5], %s199
        %s201 = sand.u32 %s44, 1
        %s202 = smul.addr %s201, 8
        %s203 = scalar_lea.vmem [#allocation4], %s202
        %p204 = pneg %p57
        %p205 = pneg %p54
        %s206 = sand.u32 %s72, 1
        %s207 = scalar_lea.sflag [#allocation8], %s206
        %s208 = sand.u32 %s72, 1
        %s209 = smul.addr %s208, 8
        %s210 = scalar_lea.vmem [#allocation7], %s209
        %p211 = pneg %p85
        %p212 = pneg %p82
        %p213 = pneg %p111
        %p214 = pneg %p108
        %s215 = sand.u32 %s98, 1
        %s216 = scalar_lea.sflag [#allocation6], %s215
        %s217 = sand.u32 %s98, 1
        %s218 = smul.addr %s217, 8
        %s219 = scalar_lea.vmem [#allocation9], %s218
        %p220 = scmp.eq.s32.totalorder %s27, 0
        // Predicated region
        $region37: #{tpu_custom_call.1} parent=27 // pred_check
          %p221 = pneg %p220
        $region38: #{tpu_custom_call.1} parent=27 // pred_check_branch
          %223 = sbr.rel (%p221) target = $region40
        $region39: #{tpu_custom_call.1} parent=27 // pred_region
          %224 = vst [vmem:[#allocation2] sm:$0x3] 0.0
          %225 = vst [vmem:[#allocation2 + $0x2] sm:$0x3] 0.0
        $region40: #{tpu_custom_call.1} parent=27 // pred_fallthru
          _
        %v226 = vld [vmem:[%s185] sm:$0x3]
        %v227 = vld [vmem:[%s185 + $0x2] sm:$0x3]
        %v228 = vld [vmem:[%s185 + $0x4] sm:$0x3]
        %v229 = vld [vmem:[%s185 + $0x6] sm:$0x3]
        %v230 = vld [vmem:[%s194] sm:$0x3]
        %v231 = vld [vmem:[%s194 + $0x2] sm:$0x3]
        %v232 = vld [vmem:[%s194 + $0x4] sm:$0x3]
        %v233 = vld [vmem:[%s194 + $0x6] sm:$0x3]
        %vm234 = vcmask 1041408
        %v235 = vsel %vm234, %v226, -inf
        %v236 = vsel %vm234, %v227, -inf
        %v237 = vsel %vm234, %v228, -inf
        %v238 = vsel %vm234, %v229, -inf
        %v239 = vmax.f32 %v235, %v236
        %v240 = vmax.f32 %v237, %v238
        %v241 = vmax.f32 %v239, %v240
        %v242 = vsub.f32 %v226, %v241
        %v243 = vsub.f32 %v227, %v241
        %v244 = vsub.f32 %v228, %v241
        %v245 = vsub.f32 %v229, %v241
        %v246 = vmul.f32 %v242, 1.442695
        %v247 = vpow.pop %v246
        %v248 = vmul.f32 %v243, 1.442695
        %v249 = vpow.pop %v248
        %v250 = vmul.f32 %v244, 1.442695
        %v251 = vpow.pop %v250
        %v252 = vmul.f32 %v245, 1.442695
        %v253 = vpow.pop %v252
        %v254 = vsel %vm234, %v247, 0.0
        %v255 = vsel %vm234, %v249, 0.0
        %v256 = vadd.f32 %v254, %v255
        %v257 = vsel %vm234, %v251, 0.0
        %v258 = vadd.f32 %v256, %v257
        %v259 = vsel %vm234, %v253, 0.0
        %v260 = vadd.f32 %v258, %v259
        %v261 = vlog2.pop %v260
        %v262 = vmul.f32 %v261, 0.6931472
        %v263 = vadd.f32 %v241, %v262
        %v264 = vsub.f32 %v226, %v263
        %v265 = vsub.f32 %v227, %v263
        %v266 = vsub.f32 %v228, %v263
        %v267 = vsub.f32 %v229, %v263
        %vm268 = vcmp.ne.f32.partialorder %v230, -1.0
        %vm269 = vcmp.ne.f32.partialorder %v231, -1.0
        %vm270 = vcmp.ne.f32.partialorder %v232, -1.0
        %vm271 = vcmp.ne.f32.partialorder %v233, -1.0
        %v272 = vsub.f32 0.0, %v264
        %v273 = vsub.f32 0.0, %v265
        %v274 = vsub.f32 0.0, %v266
        %v275 = vsub.f32 0.0, %v267
        %v276 = vmul.f32 %v272, %v230
        %v277 = vmul.f32 %v273, %v231
        %v278 = vmul.f32 %v274, %v232
        %v279 = vmul.f32 %v275, %v233
        %v280 = vsel %vm268, %v276, 0.0
        %v281 = vsel %vm269, %v277, 0.0
        %v282 = vsel %vm270, %v278, 0.0
        %v283 = vsel %vm271, %v279, 0.0
        %v284 = vsel %vm268, 1, 0
        %v285 = vsel %vm269, 1, 0
        %v286 = vsel %vm270, 1, 0
        %v287 = vsel %vm271, 1, 0
        %v288 = vcvt.s32.f32 %v284
        %v289 = vcvt.s32.f32 %v285
        %v290 = vcvt.s32.f32 %v286
        %v291 = vcvt.s32.f32 %v287
        %v292 = vld [vmem:[#allocation2] sm:$0x3]
        %v293 = vsel %vm234, %v280, 0.0
        %v294 = vsel %vm234, %v281, 0.0
        %v295 = vadd.f32 %v293, %v294
        %v296 = vsel %vm234, %v282, 0.0
        %v297 = vadd.f32 %v295, %v296
        %v298 = vsel %vm234, %v283, 0.0
        %v299 = vadd.f32 %v297, %v298
        %v300 = vadd.f32 %v292, %v299
        %301 = vst [vmem:[#allocation2] sm:$0x3] %v300
        %s302 = scalar_lea.vmem [#allocation2], 2
        %v303 = vld [vmem:[%s302] sm:$0x3]
        %v304 = vsel %vm234, %v288, 0.0
        %v305 = vsel %vm234, %v289, 0.0
        %v306 = vadd.f32 %v304, %v305
        %v307 = vsel %vm234, %v290, 0.0
        %v308 = vadd.f32 %v306, %v307
        %v309 = vsel %vm234, %v291, 0.0
        %v310 = vadd.f32 %v308, %v309
        %v311 = vadd.f32 %v303, %v310
        %312 = vst [vmem:[%s302] sm:$0x3] %v311
        // Predicated region
        $region41: #{tpu_custom_call.1} parent=27 // pred_check
          %p313 = pneg %p220
        $region42: #{tpu_custom_call.1} parent=27 // pred_check_branch
          %315 = sbr.rel (%p313) target = $region44
        $region43: #{tpu_custom_call.1} parent=27 // pred_region
          %v316 = vld [vmem:[#allocation2] sm:$0x3]
          %v317 = vsel %vm234, %v316, 0.0
          %318 = vadd.xlane.f32.xlu0 %v317
          %v319 = vpop.xlane.xlu0 %318
          %v320 = vrot.slane %v319, 4
          %v321 = vadd.f32 %v319, %v320
          %v322 = vrot.slane %v321, 2
          %v323 = vadd.f32 %v321, %v322
          %v324 = vrot.slane %v323, 1
          %v325 = vadd.f32 %v323, %v324
          %s326 = vtos %v325
          %s327 = scalar_lea.smem [#allocation3], 0
          %328 = sst [smem:[%s327]] %s326
          %v329 = vld [vmem:[%s302] sm:$0x3]
          %v330 = vsel %vm234, %v329, 0.0
          %331 = vadd.xlane.f32.xlu0 %v330
          %v332 = vpop.xlane.xlu0 %331
          %v333 = vrot.slane %v332, 4
          %v334 = vadd.f32 %v332, %v333
          %v335 = vrot.slane %v334, 2
          %v336 = vadd.f32 %v334, %v335
          %v337 = vrot.slane %v336, 1
          %v338 = vadd.f32 %v336, %v337
          %s339 = vtos %v338
          %s340 = scalar_lea.smem [#allocation3], 1
          %341 = sst [smem:[%s340]] %s339
          %v342 = vlaneseq
          %v343 = vshrl.u32 %v342, 7
          %vm344 = vcmp.eq.s32.totalorder %v343, 0
          %s345 = sld [smem:[#allocation3]]
          %v346 = vstv %s345
          %s347 = sld [smem:[#allocation3 + $0x1]]
          %v348 = vstv %s347
          %v349 = vsel %vm344, %v346, %v348
          %350 = vst [vmem:[%s219] sm:$0xff] %v349
        $region44: #{tpu_custom_call.1} parent=27 // pred_fallthru
          _
        %s351 = sand.u32 %s98, 1
        %s352 = scalar_lea.sflag [#allocation6], %s351
        %s353 = sand.u32 %s98, 1
        %s354 = smul.addr %s353, 8
        %s355 = scalar_lea.vmem [#allocation9], %s354
        // Predicated region
        $region45: #{tpu_custom_call.1} parent=27 // pred_check
          %p356 = pneg %p108
        $region46: #{tpu_custom_call.1} parent=27 // pred_check_branch
          %358 = sbr.rel (%p356) target = $region48
        $region47: #{tpu_custom_call.1} parent=27 // pred_region
          %s360 = ssub.s32 128, 128
          %361 = vsyncadd %s352, %s360
          %s362 = smul.addr %s26, 128
          %s363 = scalar_lea.hbm %s2, %s362
          %s365 = sshll.u32 %s355, 4
          %s366 = int_to_ptr.vmem [resolvable:$true] %s365
          %368 = dma.vmem_to_hbm [thread:$0]  %s366, 128, %s363, %s352
        $region48: #{tpu_custom_call.1} parent=27 // pred_fallthru
          _
      $region28: #{tpu_custom_call.1} parent=5 // pred_fallthru
        _
      %p369 = scmp.le.s32.totalorder 2, %s17
      // Predicated region
      $region49: #{tpu_custom_call.1} parent=5 // pred_check
        %p370 = pneg %p369
      $region50: #{tpu_custom_call.1} parent=5 // pred_check_branch
        %372 = sbr.rel (%p370) target = $region52
      $region51: #{tpu_custom_call.1} parent=5 // pred_region
        %s373 = ssub.s32 %s17, 2
        // Predicated region
        $region53: #{tpu_custom_call.1} parent=51 // pred_check
          %p374 = pneg %p114
        $region54: #{tpu_custom_call.1} parent=51 // pred_check_branch
          %376 = sbr.rel (%p374) target = $region56
        $region55: #{tpu_custom_call.1} parent=51 // pred_region
          %s377 = sand.u32 %s99, 1
          %s378 = scalar_lea.sflag [#allocation6], %s377
          %s379 = sand.u32 %s99, 1
          %s380 = smul.addr %s379, 8
          %s381 = scalar_lea.vmem [#allocation9], %s380
          %382 = dma.done %s378, 128
        $region56: #{tpu_custom_call.1} parent=51 // pred_fallthru
          _
      $region52: #{tpu_custom_call.1} parent=5 // pred_fallthru
        _
    $region6: #{tpu_custom_call.1} parent=1 // loop_footer
      %s21 = sadd.s32 1, %s17
    $region7: #{tpu_custom_call.1} parent=1 // loop_footer_branch
      %16 = sbr.rel target = $region3
    $region8: #{tpu_custom_call.1} parent=1 // loop_exit
      _
    %383 = vsyncpa [#allocation5], 1
    %s384 = scalar_lea.sflag [#allocation5], 1
    %385 = vsyncpa %s384, 1
    %386 = vsyncpa [#allocation8], 1
    %s387 = scalar_lea.sflag [#allocation8], 1
    %388 = vsyncpa %s387, 1
    %389 = vsyncpa [#allocation6], 1
    %s390 = scalar_lea.sflag [#allocation6], 1
    %391 = vsyncpa %s390, 1

</llo_original>
